<compile_context>
chip_gen: v7x
topology: tpu7x:2x2x1
jax: 0.10.0
libtpu: 0.0.40
codegen_flags: <defaults>
</compile_context>

<pallas_src>
import numpy as np
import jax
import jax.numpy as jnp
from jax import lax
from jax.experimental import pallas as pl
from jax.experimental.pallas import tpu as pltpu


def _round_up(v, m):
    return ((v + m - 1) // m) * m


def _cdiv(a, b):
    return (a + b - 1) // b


def dws_conv_block1d(x, x_len, w_dw, w_pw, bn_gamma, bn_beta, bn_mean, bn_var,
                     *, kernel_size, stride=1, padding=0, dilation=1,
                     bn_eps=1e-5, apply_relu=True, tile_t_target=512,
                     min_grid_steps=8):
    """Forward pass of DwsConvBlock1d (groups=1, bias=False, eval-mode BN).

    x      : (B, C_in, T)     float32, PyTorch NCT layout
    x_len  : (B,)             int valid lengths
    w_dw   : (C_in, 1, K)     depthwise conv weight
    w_pw   : (C_out, C_in, 1) pointwise conv weight
    bn_*   : (C_out,)         BatchNorm1d affine params / running statistics
    Returns (out, x_len_out) with out of shape (B, C_out, T_out), like the module.
    """
    if stride != 1:
        # TODO(synk): stride > 1 needs a strided in-kernel row gather; Jasper's
        # DwsConvBlock1d always uses stride=1.
        raise NotImplementedError("stride != 1 not supported")
    # TODO(synk): groups > 1 pointwise conv + ChannelShuffle1d not implemented
    #             (module default groups=1); dropout_rate > 0 is a no-op in eval
    #             mode; training-mode BN (batch statistics) is not computed here.

    B, C_in, T = x.shape
    C_out = w_pw.shape[0]
    K, D, P = kernel_size, dilation, padding

    T_out = (T + 2 * P - D * (K - 1) - 1) // stride + 1
    x_len = x_len.astype(jnp.int32)
    # dw conv updates x_len; the 1x1 pw conv (k=1, s=1, p=0) leaves it unchanged.
    x_len_out = (x_len + 2 * P - D * (K - 1) - 1) // stride + 1

    # ---- tile geometry -------------------------------------------------------
    # HALO rows cover the receptive-field overhang; 16-row alignment keeps bf16
    # sublane packing clean and lets the halo BlockSpec index in HALO-row blocks.
    halo = max(D * (K - 1), 1)
    HALO = _round_up(halo, 16)
    tile_t = max(HALO, (tile_t_target // HALO) * HALO)   # multiple of HALO
    tile_t = min(tile_t, _round_up(T_out, HALO))         # don't over-tile tiny T
    # keep enough grid steps for 2-TC chips / pipelining
    while B * _cdiv(T_out, tile_t) < min_grid_steps and tile_t > HALO:
        new_tile = max(HALO, ((tile_t // 2) // HALO) * HALO)
        if new_tile == tile_t:
            break
        tile_t = new_tile
    n_t = _cdiv(T_out, tile_t)
    T_src = n_t * tile_t + HALO                          # just enough for last halo
    assert T_src >= P + T
    K8 = _round_up(K, 8)

    # ---- host-side prep (layout plumbing + constant folding, fused by XLA) ---
    # outmask_fill #1, NCT -> time-major (B, T, C), conv zero padding, bf16 I/O.
    mask1 = (jnp.arange(T, dtype=jnp.int32)[None, :] < x_len[:, None])[:, :, None]
    x_tm = jnp.where(mask1, jnp.transpose(x, (0, 2, 1)), 0.0)
    x_src = jnp.pad(x_tm, ((0, 0), (P, T_src - P - T), (0, 0))).astype(jnp.bfloat16)

    # depthwise weight as (K8, C_in) f32, taps beyond K zero padded.
    wdw = jnp.zeros((K8, C_in), jnp.float32).at[:K, :].set(
        jnp.transpose(w_dw[:, 0, :], (1, 0)))

    # Fold eval-mode BatchNorm into the pointwise conv (conv -> BN is affine).
    scale = bn_gamma / jnp.sqrt(bn_var + bn_eps)                   # (C_out,)
    wpw_bf = (jnp.transpose(w_pw[:, :, 0], (1, 0))
              * scale[None, :]).astype(jnp.bfloat16)               # (C_in, C_out)
    bias_f = (bn_beta - bn_mean * scale)[None, :].astype(jnp.float32)  # (1, C_out)

    # ---- the fused kernel ----------------------------------------------------
    def kernel(xlen_ref, x_ref, halo_ref, wdw_ref, wpw_ref, bias_ref, o_ref, xbuf):
        b = pl.program_id(0)
        t = pl.program_id(1)
        L = xlen_ref[b]                         # valid output rows for sample b
        tile_is_live = (t * tile_t) < L

        @pl.when(tile_is_live)
        def _():
            # Stage tile + halo ONCE into an f32 VMEM scratch; the per-tap reads
            # below are plain sublane-offset ref loads (no value concatenate /
            # XLU rotates) and the bf16->f32 upconvert happens exactly once.
            xbuf[0:tile_t, :] = x_ref[0].astype(jnp.float32)
            xbuf[tile_t:tile_t + HALO, :] = halo_ref[0].astype(jnp.float32)

            # depthwise conv (stride 1), f32 accumulation on the VPU:
            #   out[r, c] = sum_k w[k, c] * x[r + k*D, c]
            acc = xbuf[pl.ds(0, tile_t), :] * wdw_ref[pl.ds(0, 1), :]
            for k in range(1, K):
                acc = acc + (xbuf[pl.ds(k * D, tile_t), :]
                             * wdw_ref[pl.ds(k, 1), :])

            # outmask_fill #2 (after the depthwise MaskConv1d)
            row = t * tile_t + lax.broadcasted_iota(jnp.int32, (tile_t, 1), 0)
            dw = jnp.where(row < L, acc, 0.0)

            # pointwise 1x1 conv with folded BN: bf16 MXU matmul, f32 accumulate,
            # lane-dense (tile_t, C_out) output block.
            z = jnp.dot(dw.astype(jnp.bfloat16), wpw_ref[...],
                        preferred_element_type=jnp.float32)
            y = z + bias_ref[...]
            if apply_relu:
                y = jnp.maximum(y, 0.0)
            o_ref[0] = y.astype(o_ref.dtype)

        @pl.when(jnp.logical_not(tile_is_live))
        def _():
            # Fully length-masked tile: depthwise output is all zeros, so the
            # block result is just relu(folded-BN bias); skip the dw loop + matmul.
            yb = bias_ref[...]
            if apply_relu:
                yb = jnp.maximum(yb, 0.0)
            o_ref[0] = jnp.broadcast_to(yb, (tile_t, C_out)).astype(o_ref.dtype)

    # ---- VMEM budget / compiler params ---------------------------------------
    vmem_need = (2 * (tile_t * C_in + HALO * C_in + tile_t * C_out) * 2   # bf16 I/O, dbl-buffered
                 + (tile_t + HALO) * C_in * 4                             # f32 scratch
                 + K8 * C_in * 4 + C_in * C_out * 2 + C_out * 4)          # weights / bias
    vmem_limit = None
    if vmem_need > (24 << 20):
        # leave headroom but stay within v7x's 64 MiB physical VMEM per core
        vmem_limit = int(min(max(2 * vmem_need, 48 << 20), 64 << 20))

    cost = pl.CostEstimate(
        flops=int(2 * B * T_out * C_in * (K + C_out)),
        transcendentals=0,
        bytes_accessed=int(x_src.size * 2 + B * n_t * tile_t * C_out * 2
                           + K8 * C_in * 4 + C_in * C_out * 2 + C_out * 4))

    grid_spec = pltpu.PrefetchScalarGridSpec(
        num_scalar_prefetch=1,
        grid=(B, n_t),
        in_specs=[
            # main time tile
            pl.BlockSpec((1, tile_t, C_in), lambda b, t, xl: (b, t, 0)),
            # halo tile (same array, HALO-row blocks, starting right after the tile)
            pl.BlockSpec((1, HALO, C_in),
                         lambda b, t, xl: (b, (t + 1) * (tile_t // HALO), 0)),
            pl.BlockSpec((K8, C_in), lambda b, t, xl: (0, 0)),
            pl.BlockSpec((C_in, C_out), lambda b, t, xl: (0, 0)),
            pl.BlockSpec((1, C_out), lambda b, t, xl: (0, 0)),
        ],
        out_specs=pl.BlockSpec((1, tile_t, C_out), lambda b, t, xl: (b, t, 0)),
        scratch_shapes=[pltpu.VMEM((tile_t + HALO, C_in), jnp.float32)],
    )

    out_tm = pl.pallas_call(
        kernel,
        out_shape=jax.ShapeDtypeStruct((B, n_t * tile_t, C_out), jnp.bfloat16),
        grid_spec=grid_spec,
        compiler_params=pltpu.CompilerParams(
            dimension_semantics=("parallel", "parallel"),
            vmem_limit_bytes=vmem_limit),
        cost_estimate=cost,
    )(x_len_out, x_src, x_src, wdw, wpw_bf, bias_f)

    # lane-dense kernel output (B, rows, C_out) -> PyTorch NCT layout
    out = jnp.transpose(out_tm[:, :T_out, :], (0, 2, 1)).astype(jnp.float32)
    return out, x_len_out


# ------------------------- pure-JAX reference (spec math) ---------------------
def _reference(x, x_len, w_dw, w_pw, bn_gamma, bn_beta, bn_mean, bn_var,
               *, kernel_size, stride, padding, dilation, bn_eps):
    B, C_in, T = x.shape
    K, D, P, S = kernel_size, dilation, padding, stride
    x_len = x_len.astype(jnp.int32)
    mask1 = (jnp.arange(T)[None, :] < x_len[:, None])[:, None, :]
    xm = jnp.where(mask1, x, 0.0)
    xp = jnp.pad(xm, ((0, 0), (0, 0), (P, P)))
    T_out = (T + 2 * P - D * (K - 1) - 1) // S + 1
    dw = jnp.zeros((B, C_in, T_out), jnp.float32)
    for k in range(K):
        sl = lax.slice_in_dim(xp, k * D, k * D + (T_out - 1) * S + 1, stride=S, axis=2)
        dw = dw + w_dw[None, :, 0, k, None] * sl
    x_len2 = (x_len + 2 * P - D * (K - 1) - 1) // S + 1
    mask2 = (jnp.arange(T_out)[None, :] < x_len2[:, None])[:, None, :]
    dwm = jnp.where(mask2, dw, 0.0)
    pw = jnp.einsum('oc,bct->bot', w_pw[:, :, 0], dwm,
                    precision=lax.Precision.HIGHEST)
    inv = 1.0 / jnp.sqrt(bn_var + bn_eps)
    y = ((pw - bn_mean[None, :, None]) * inv[None, :, None] * bn_gamma[None, :, None]
         + bn_beta[None, :, None])
    return jnp.maximum(y, 0.0), x_len2


# ----------------------------------- main --------------------------------------
if __name__ == "__main__":
    B, C_in, C_out, T = 2, 128, 128, 128
    K, S, P, D = 11, 1, 5, 1
    EPS = 1e-5

    key = jax.random.PRNGKey(0)
    ks = jax.random.split(key, 6)
    x = jax.random.normal(ks[0], (B, C_in, T), dtype=jnp.float32)
    x_len = jnp.array([T, 93], dtype=jnp.int32)
    w_dw = jax.random.normal(ks[1], (C_in, 1, K), jnp.float32) / np.sqrt(K)
    w_pw = jax.random.normal(ks[2], (C_out, C_in, 1), jnp.float32) / np.sqrt(C_in)
    bn_gamma = 1.0 + 0.1 * jax.random.normal(ks[3], (C_out,), jnp.float32)
    bn_beta = 0.1 * jax.random.normal(ks[4], (C_out,), jnp.float32)
    bn_mean = 0.1 * jax.random.normal(ks[5], (C_out,), jnp.float32)
    bn_var = jnp.full((C_out,), 0.9, jnp.float32)

    out, out_len = dws_conv_block1d(
        x, x_len, w_dw, w_pw, bn_gamma, bn_beta, bn_mean, bn_var,
        kernel_size=K, stride=S, padding=P, dilation=D, bn_eps=EPS)
    out = jax.block_until_ready(out)
    out_len = jax.block_until_ready(out_len)

    T_out = (T + 2 * P - D * (K - 1) - 1) // S + 1
    assert out.shape == (B, C_out, T_out), out.shape
    assert bool(jnp.all(jnp.isfinite(out)))

    ref, ref_len = _reference(
        x, x_len, w_dw, w_pw, bn_gamma, bn_beta, bn_mean, bn_var,
        kernel_size=K, stride=S, padding=P, dilation=D, bn_eps=EPS)
    assert bool(jnp.all(out_len == ref_len))

    # bf16 HBM I/O + bf16 MXU matmul (f32 accumulation): tolerances sized for
    # bf16 rounding of x, dw, and the folded pointwise weights.
    abs_err = jnp.abs(out - ref)
    max_err = float(jnp.max(abs_err))
    mean_err = float(jnp.mean(abs_err))
    max_ref = float(jnp.max(jnp.abs(ref)))
    assert max_err < 1e-1, (max_err, max_ref)
    assert max_err <= 3e-2 * max(max_ref, 1.0), (max_err, max_ref)
    assert mean_err < 1e-2, mean_err

    print("KERNEL_OK")
</pallas_src>

<mosaic_0001>
module attributes {stable_mosaic.version = 11 : i64} {
  func.func @kernel(%arg0: i32, %arg1: i32, %arg2: memref<2xi32, #tpu.memory_space<smem>>, %arg3: memref<1x32x128xbf16, #tpu.memory_space<vmem>>, %arg4: memref<1x16x128xbf16, #tpu.memory_space<vmem>>, %arg5: memref<16x128xf32, #tpu.memory_space<vmem>>, %arg6: memref<128x128xbf16, #tpu.memory_space<vmem>>, %arg7: memref<1x128xf32, #tpu.memory_space<vmem>>, %arg8: memref<1x32x128xbf16, #tpu.memory_space<vmem>>, %arg9: memref<48x128xf32, #tpu.memory_space<vmem>>) attributes {dimension_semantics = [#tpu.dimension_semantics<parallel>, #tpu.dimension_semantics<parallel>], iteration_bounds = array<i64: 2, 4>, scalar_prefetch = 1 : i64, scratch_operands = 1 : i64, tpu.core_type = #tpu.core_type<tc>, window_params = [{transform_indices = @transform_0, window_bounds = array<i64: 1, 32, 128>}, {transform_indices = @transform_1, window_bounds = array<i64: 1, 16, 128>}, {pipeline_mode = #tpu.pipeline_mode<synchronous>, transform_indices = @transform_2, window_bounds = array<i64: 16, 128>}, {pipeline_mode = #tpu.pipeline_mode<synchronous>, transform_indices = @transform_3, window_bounds = array<i64: 128, 128>}, {pipeline_mode = #tpu.pipeline_mode<synchronous>, transform_indices = @transform_4, window_bounds = array<i64: 1, 128>}, {transform_indices = @transform_5, window_bounds = array<i64: 1, 32, 128>}]} {
    %0 = arith.index_cast %arg0 : i32 to index
    %1 = memref.load %arg2[%0] : memref<2xi32, #tpu.memory_space<smem>>
    %c32_i32 = arith.constant 32 : i32
    %2 = arith.muli %arg1, %c32_i32 : i32
    %3 = arith.cmpi slt, %2, %1 : i32
    %4 = arith.extui %3 : i1 to i32
    %c0_i32 = arith.constant 0 : i32
    %5 = arith.cmpi ne, %4, %c0_i32 : i32
    scf.if %5 {
      %c0 = arith.constant 0 : index
      %c0_1 = arith.constant 0 : index
      %c0_2 = arith.constant 0 : index
      %9 = vector.load %arg3[%c0, %c0_1, %c0_2] : memref<1x32x128xbf16, #tpu.memory_space<vmem>>, vector<1x32x128xbf16>
      %10 = vector.shape_cast %9 : vector<1x32x128xbf16> to vector<32x128xbf16>
      %11 = arith.extf %10 : vector<32x128xbf16> to vector<32x128xf32>
      %c0_3 = arith.constant 0 : index
      %c0_4 = arith.constant 0 : index
      %12 = vector.load %arg9[%c0_3, %c0_4] : memref<48x128xf32, #tpu.memory_space<vmem>>, vector<32x128xf32>
      tpu.vector_store %arg9[%c0_3, %c0_4], %11 {strides = array<i32>} : memref<48x128xf32, #tpu.memory_space<vmem>>, vector<32x128xf32>,
      %c0_5 = arith.constant 0 : index
      %c0_6 = arith.constant 0 : index
      %c0_7 = arith.constant 0 : index
      %13 = vector.load %arg4[%c0_5, %c0_6, %c0_7] : memref<1x16x128xbf16, #tpu.memory_space<vmem>>, vector<1x16x128xbf16>
      %14 = vector.shape_cast %13 : vector<1x16x128xbf16> to vector<16x128xbf16>
      %15 = arith.extf %14 : vector<16x128xbf16> to vector<16x128xf32>
      %c32 = arith.constant 32 : index
      %c0_8 = arith.constant 0 : index
      %16 = vector.load %arg9[%c32, %c0_8] : memref<48x128xf32, #tpu.memory_space<vmem>>, vector<16x128xf32>
      tpu.vector_store %arg9[%c32, %c0_8], %15 {strides = array<i32>} : memref<48x128xf32, #tpu.memory_space<vmem>>, vector<16x128xf32>,
      %c0_9 = arith.constant 0 : index
      %c0_10 = arith.constant 0 : index
      %17 = vector.load %arg9[%c0_9, %c0_10] : memref<48x128xf32, #tpu.memory_space<vmem>>, vector<32x128xf32>
      %c0_11 = arith.constant 0 : index
      %c0_12 = arith.constant 0 : index
      %18 = vector.load %arg5[%c0_11, %c0_12] : memref<16x128xf32, #tpu.memory_space<vmem>>, vector<1x128xf32>
      %19 = vector.broadcast %18 : vector<1x128xf32> to vector<32x128xf32>
      %20 = arith.mulf %17, %19 : vector<32x128xf32>
      %c1 = arith.constant 1 : index
      %c0_13 = arith.constant 0 : index
      %21 = vector.load %arg9[%c1, %c0_13] : memref<48x128xf32, #tpu.memory_space<vmem>>, vector<32x128xf32>
      %c1_14 = arith.constant 1 : index
      %c0_15 = arith.constant 0 : index
      %22 = vector.load %arg5[%c1_14, %c0_15] : memref<16x128xf32, #tpu.memory_space<vmem>>, vector<1x128xf32>
      %23 = vector.broadcast %22 : vector<1x128xf32> to vector<32x128xf32>
      %24 = arith.mulf %21, %23 : vector<32x128xf32>
      %25 = arith.addf %20, %24 : vector<32x128xf32>
      %c2 = arith.constant 2 : index
      %c0_16 = arith.constant 0 : index
      %26 = vector.load %arg9[%c2, %c0_16] : memref<48x128xf32, #tpu.memory_space<vmem>>, vector<32x128xf32>
      %c2_17 = arith.constant 2 : index
      %c0_18 = arith.constant 0 : index
      %27 = vector.load %arg5[%c2_17, %c0_18] : memref<16x128xf32, #tpu.memory_space<vmem>>, vector<1x128xf32>
      %28 = vector.broadcast %27 : vector<1x128xf32> to vector<32x128xf32>
      %29 = arith.mulf %26, %28 : vector<32x128xf32>
      %30 = arith.addf %25, %29 : vector<32x128xf32>
      %c3 = arith.constant 3 : index
      %c0_19 = arith.constant 0 : index
      %31 = vector.load %arg9[%c3, %c0_19] : memref<48x128xf32, #tpu.memory_space<vmem>>, vector<32x128xf32>
      %c3_20 = arith.constant 3 : index
      %c0_21 = arith.constant 0 : index
      %32 = vector.load %arg5[%c3_20, %c0_21] : memref<16x128xf32, #tpu.memory_space<vmem>>, vector<1x128xf32>
      %33 = vector.broadcast %32 : vector<1x128xf32> to vector<32x128xf32>
      %34 = arith.mulf %31, %33 : vector<32x128xf32>
      %35 = arith.addf %30, %34 : vector<32x128xf32>
      %c4 = arith.constant 4 : index
      %c0_22 = arith.constant 0 : index
      %36 = vector.load %arg9[%c4, %c0_22] : memref<48x128xf32, #tpu.memory_space<vmem>>, vector<32x128xf32>
      %c4_23 = arith.constant 4 : index
      %c0_24 = arith.constant 0 : index
      %37 = vector.load %arg5[%c4_23, %c0_24] : memref<16x128xf32, #tpu.memory_space<vmem>>, vector<1x128xf32>
      %38 = vector.broadcast %37 : vector<1x128xf32> to vector<32x128xf32>
      %39 = arith.mulf %36, %38 : vector<32x128xf32>
      %40 = arith.addf %35, %39 : vector<32x128xf32>
      %c5 = arith.constant 5 : index
      %c0_25 = arith.constant 0 : index
      %41 = vector.load %arg9[%c5, %c0_25] : memref<48x128xf32, #tpu.memory_space<vmem>>, vector<32x128xf32>
      %c5_26 = arith.constant 5 : index
      %c0_27 = arith.constant 0 : index
      %42 = vector.load %arg5[%c5_26, %c0_27] : memref<16x128xf32, #tpu.memory_space<vmem>>, vector<1x128xf32>
      %43 = vector.broadcast %42 : vector<1x128xf32> to vector<32x128xf32>
      %44 = arith.mulf %41, %43 : vector<32x128xf32>
      %45 = arith.addf %40, %44 : vector<32x128xf32>
      %c6 = arith.constant 6 : index
      %c0_28 = arith.constant 0 : index
      %46 = vector.load %arg9[%c6, %c0_28] : memref<48x128xf32, #tpu.memory_space<vmem>>, vector<32x128xf32>
      %c6_29 = arith.constant 6 : index
      %c0_30 = arith.constant 0 : index
      %47 = vector.load %arg5[%c6_29, %c0_30] : memref<16x128xf32, #tpu.memory_space<vmem>>, vector<1x128xf32>
      %48 = vector.broadcast %47 : vector<1x128xf32> to vector<32x128xf32>
      %49 = arith.mulf %46, %48 : vector<32x128xf32>
      %50 = arith.addf %45, %49 : vector<32x128xf32>
      %c7 = arith.constant 7 : index
      %c0_31 = arith.constant 0 : index
      %51 = vector.load %arg9[%c7, %c0_31] : memref<48x128xf32, #tpu.memory_space<vmem>>, vector<32x128xf32>
      %c7_32 = arith.constant 7 : index
      %c0_33 = arith.constant 0 : index
      %52 = vector.load %arg5[%c7_32, %c0_33] : memref<16x128xf32, #tpu.memory_space<vmem>>, vector<1x128xf32>
      %53 = vector.broadcast %52 : vector<1x128xf32> to vector<32x128xf32>
      %54 = arith.mulf %51, %53 : vector<32x128xf32>
      %55 = arith.addf %50, %54 : vector<32x128xf32>
      %c8 = arith.constant 8 : index
      %c0_34 = arith.constant 0 : index
      %56 = vector.load %arg9[%c8, %c0_34] : memref<48x128xf32, #tpu.memory_space<vmem>>, vector<32x128xf32>
      %c8_35 = arith.constant 8 : index
      %c0_36 = arith.constant 0 : index
      %57 = vector.load %arg5[%c8_35, %c0_36] : memref<16x128xf32, #tpu.memory_space<vmem>>, vector<1x128xf32>
      %58 = vector.broadcast %57 : vector<1x128xf32> to vector<32x128xf32>
      %59 = arith.mulf %56, %58 : vector<32x128xf32>
      %60 = arith.addf %55, %59 : vector<32x128xf32>
      %c9 = arith.constant 9 : index
      %c0_37 = arith.constant 0 : index
      %61 = vector.load %arg9[%c9, %c0_37] : memref<48x128xf32, #tpu.memory_space<vmem>>, vector<32x128xf32>
      %c9_38 = arith.constant 9 : index
      %c0_39 = arith.constant 0 : index
      %62 = vector.load %arg5[%c9_38, %c0_39] : memref<16x128xf32, #tpu.memory_space<vmem>>, vector<1x128xf32>
      %63 = vector.broadcast %62 : vector<1x128xf32> to vector<32x128xf32>
      %64 = arith.mulf %61, %63 : vector<32x128xf32>
      %65 = arith.addf %60, %64 : vector<32x128xf32>
      %c10 = arith.constant 10 : index
      %c0_40 = arith.constant 0 : index
      %66 = vector.load %arg9[%c10, %c0_40] : memref<48x128xf32, #tpu.memory_space<vmem>>, vector<32x128xf32>
      %c10_41 = arith.constant 10 : index
      %c0_42 = arith.constant 0 : index
      %67 = vector.load %arg5[%c10_41, %c0_42] : memref<16x128xf32, #tpu.memory_space<vmem>>, vector<1x128xf32>
      %68 = vector.broadcast %67 : vector<1x128xf32> to vector<32x128xf32>
      %69 = arith.mulf %66, %68 : vector<32x128xf32>
      %70 = arith.addf %65, %69 : vector<32x128xf32>
      %c32_i32_43 = arith.constant 32 : i32
      %71 = arith.muli %arg1, %c32_i32_43 : i32
      %72 = tpu.iota {dimensions = array<i32: 0>} : vector<32x1xi32>
      %73 = vector.broadcast %71 : i32 to vector<32x1xi32>
      %74 = arith.addi %73, %72 : vector<32x1xi32>
      %75 = vector.broadcast %1 : i32 to vector<32x1xi32>
      %76 = arith.cmpi slt, %74, %75 : vector<32x1xi32>
      %cst = arith.constant 0.000000e+00 : f32
      %77 = vector.shape_cast %76 : vector<32x1xi1> to vector<32x1xi1>
      %78 = vector.broadcast %77 : vector<32x1xi1> to vector<32x128xi1>
      %79 = vector.broadcast %cst : f32 to vector<32x128xf32>
      %80 = arith.select %78, %70, %79 : vector<32x128xi1>, vector<32x128xf32>
      %81 = arith.truncf %80 : vector<32x128xf32> to vector<32x128xbf16>
      %c0_44 = arith.constant 0 : index
      %c0_45 = arith.constant 0 : index
      %82 = vector.load %arg6[%c0_44, %c0_45] : memref<128x128xbf16, #tpu.memory_space<vmem>>, vector<128x128xbf16>
      %cst_46 = arith.constant dense<0.000000e+00> : vector<32x128xf32>
      %83 = tpu.matmul %81, %82, %cst_46 {dimension_numbers = #tpu.dot_dimension_numbers<[1], [0], [0], [1], [0, 0, 1, 1], [], []>} : vector<32x128xbf16>, vector<128x128xbf16>, vector<32x128xf32> -> vector<32x128xf32>
      %c0_47 = arith.constant 0 : index
      %c0_48 = arith.constant 0 : index
      %84 = vector.load %arg7[%c0_47, %c0_48] : memref<1x128xf32, #tpu.memory_space<vmem>>, vector<1x128xf32>
      %85 = vector.broadcast %84 : vector<1x128xf32> to vector<32x128xf32>
      %86 = arith.addf %83, %85 : vector<32x128xf32>
      %cst_49 = arith.constant 0.000000e+00 : f32
      %87 = vector.broadcast %cst_49 : f32 to vector<32x128xf32>
      %88 = arith.maximumf %86, %87 : vector<32x128xf32>
      %89 = arith.truncf %88 : vector<32x128xf32> to vector<32x128xbf16>
      %c0_50 = arith.constant 0 : index
      %c0_51 = arith.constant 0 : index
      %c0_52 = arith.constant 0 : index
      %90 = vector.load %arg8[%c0_50, %c0_51, %c0_52] : memref<1x32x128xbf16, #tpu.memory_space<vmem>>, vector<1x32x128xbf16>
      %91 = vector.shape_cast %90 : vector<1x32x128xbf16> to vector<32x128xbf16>
      %92 = vector.shape_cast %89 : vector<32x128xbf16> to vector<1x32x128xbf16>
      tpu.vector_store %arg8[%c0_50, %c0_51, %c0_52], %92 {strides = array<i32>} : memref<1x32x128xbf16, #tpu.memory_space<vmem>>, vector<1x32x128xbf16>,
    } else {
    }
    %true = arith.constant true
    %6 = arith.xori %3, %true : i1
    %7 = arith.extui %6 : i1 to i32
    %c0_i32_0 = arith.constant 0 : i32
    %8 = arith.cmpi ne, %7, %c0_i32_0 : i32
    scf.if %8 {
      %c0 = arith.constant 0 : index
      %c0_1 = arith.constant 0 : index
      %9 = vector.load %arg7[%c0, %c0_1] : memref<1x128xf32, #tpu.memory_space<vmem>>, vector<1x128xf32>
      %cst = arith.constant 0.000000e+00 : f32
      %10 = vector.broadcast %cst : f32 to vector<1x128xf32>
      %11 = arith.maximumf %9, %10 : vector<1x128xf32>
      %12 = vector.shape_cast %11 : vector<1x128xf32> to vector<1x128xf32>
      %13 = vector.broadcast %12 : vector<1x128xf32> to vector<32x128xf32>
      %14 = arith.truncf %13 : vector<32x128xf32> to vector<32x128xbf16>
      %c0_2 = arith.constant 0 : index
      %c0_3 = arith.constant 0 : index
      %c0_4 = arith.constant 0 : index
      %15 = vector.load %arg8[%c0_2, %c0_3, %c0_4] : memref<1x32x128xbf16, #tpu.memory_space<vmem>>, vector<1x32x128xbf16>
      %16 = vector.shape_cast %15 : vector<1x32x128xbf16> to vector<32x128xbf16>
      %17 = vector.shape_cast %14 : vector<32x128xbf16> to vector<1x32x128xbf16>
      tpu.vector_store %arg8[%c0_2, %c0_3, %c0_4], %17 {strides = array<i32>} : memref<1x32x128xbf16, #tpu.memory_space<vmem>>, vector<1x32x128xbf16>,
    } else {
    }
    return
  }
  func.func @transform_0(%arg0: i32, %arg1: i32, %arg2: memref<2xi32, #tpu.memory_space<smem>>) -> (i32, i32, i32) {
    %c0_i32 = arith.constant 0 : i32
    %c0_i32_0 = arith.constant 0 : i32
    return %arg0, %arg1, %c0_i32 : i32, i32, i32
  }
  func.func @transform_1(%arg0: i32, %arg1: i32, %arg2: memref<2xi32, #tpu.memory_space<smem>>) -> (i32, i32, i32) {
    %c1_i32 = arith.constant 1 : i32
    %0 = arith.addi %arg1, %c1_i32 : i32
    %c2_i32 = arith.constant 2 : i32
    %1 = arith.muli %0, %c2_i32 : i32
    %c0_i32 = arith.constant 0 : i32
    %c0_i32_0 = arith.constant 0 : i32
    return %arg0, %1, %c0_i32 : i32, i32, i32
  }
  func.func @transform_2(%arg0: i32, %arg1: i32, %arg2: memref<2xi32, #tpu.memory_space<smem>>) -> (i32, i32) {
    %c0_i32 = arith.constant 0 : i32
    %c0_i32_0 = arith.constant 0 : i32
    %c0_i32_1 = arith.constant 0 : i32
    return %c0_i32, %c0_i32_0 : i32, i32
  }
  func.func @transform_3(%arg0: i32, %arg1: i32, %arg2: memref<2xi32, #tpu.memory_space<smem>>) -> (i32, i32) {
    %c0_i32 = arith.constant 0 : i32
    %c0_i32_0 = arith.constant 0 : i32
    %c0_i32_1 = arith.constant 0 : i32
    return %c0_i32, %c0_i32_0 : i32, i32
  }
  func.func @transform_4(%arg0: i32, %arg1: i32, %arg2: memref<2xi32, #tpu.memory_space<smem>>) -> (i32, i32) {
    %c0_i32 = arith.constant 0 : i32
    %c0_i32_0 = arith.constant 0 : i32
    %c0_i32_1 = arith.constant 0 : i32
    return %c0_i32, %c0_i32_0 : i32, i32
  }
  func.func @transform_5(%arg0: i32, %arg1: i32, %arg2: memref<2xi32, #tpu.memory_space<smem>>) -> (i32, i32, i32) {
    %c0_i32 = arith.constant 0 : i32
    %c0_i32_0 = arith.constant 0 : i32
    return %arg0, %arg1, %c0_i32 : i32, i32, i32
  }
}

</mosaic_0001>

<llo_original>
// kernel: tpu_custom_call.1
$region0: #{tpu_custom_call.1}
  #allocation0 [shape = 'u32[]', space=smem, size = 0x4, offset = 0x4, fixed_abs, tag = 'smem constant byte address 0x4 - core index']
  #allocation1 [shape = 'u32[144,128]{1,0:T(1,128)}', space=vmem, size = 0x12000, scoped, tag = 'internal scratch']
  #allocation2 [shape = 'f32[48,128]{1,0:T(8,128)}', space=vmem, size = 0x6000, scoped, tag = 'scratch operand']
  #allocation3 [shape = 's32[1]{0}', space=sflag, size = 0x4, scoped, tag = 'scoped memory for tpu_custom_call.1']
  #allocation4 [shape = 'u8[512]{0}', space=smem, size = 0x200, scoped, tag = 'prefetched SMEM operand 0']
  %s0 = inlined_call_operand.hbm [shape: s32[2], index: 0, kind: input, shape index: {}]
  %s1 = inlined_call_operand.hbm [shape: bf16[2,144,128], index: 1, kind: input, shape index: {}]
  %s2 = inlined_call_operand.hbm [shape: bf16[2,144,128], index: 2, kind: input, shape index: {}]
  %s3 = inlined_call_operand.hbm [shape: f32[16,128], index: 3, kind: input, shape index: {}]
  %s4 = inlined_call_operand.hbm [shape: bf16[128,128], index: 4, kind: input, shape index: {}]
  %s5 = inlined_call_operand.vmem [shape: f32[1,128], index: 5, kind: input, shape index: {}]
  %s6 = inlined_call_operand.hbm [shape: bf16[2,128,128], index: 6, kind: output, shape index: {}]
  %s7 = sld [smem:[#allocation0]]
  $region77: #{tpu_custom_call.1} parent=0
    _
  %s9 = ssub.s32 1, %s7
  %s10 = scalar_select 0, %s9, %s7
  %12 = dma.hbm_to_smem %s0, 16, [#allocation4], [#allocation3]
  %13 = dma.done [#allocation3], 16
  %14 = sfence
  $region1: #{tpu_custom_call.1} parent=0
    #allocation5 [shape = 'u8[16384]{0}', space=vmem, size = 0x4000, scoped, tag = 'input window, operand 1']
    #allocation6 [shape = 's32[2]{0}', space=sflag, size = 0x8, scoped, tag = 'scoped memory for tpu_custom_call.1']
    #allocation7 [shape = 's32[2]{0}', space=sflag, size = 0x8, scoped, tag = 'scoped memory for tpu_custom_call.1']
    #allocation8 [shape = 'u8[8192]{0}', space=vmem, size = 0x2000, scoped, tag = 'input window, operand 2']
    #allocation9 [shape = 's32[2]{0}', space=sflag, size = 0x8, scoped, tag = 'scoped memory for tpu_custom_call.1']
    #allocation10 [shape = 'u8[8192]{0}', space=vmem, size = 0x2000, scoped, tag = 'input window, operand 3, single buffered']
    #allocation11 [shape = 'u8[32768]{0}', space=vmem, size = 0x8000, scoped, tag = 'input window, operand 4, single buffered']
    #allocation12 [shape = 's32[1]{0}', space=sflag, size = 0x4, scoped, tag = 'scoped memory for tpu_custom_call.1']
    #allocation13 [shape = 'u8[16384]{0}', space=vmem, size = 0x4000, scoped, tag = 'output window, operand 0']
    %15 = vsyncpa [#allocation6], 0
    %s16 = scalar_lea.sflag [#allocation6], 1
    %17 = vsyncpa %s16, 0
    %18 = vsyncpa [#allocation9], 0
    %s19 = scalar_lea.sflag [#allocation9], 1
    %20 = vsyncpa %s19, 0
    %21 = vsyncpa [#allocation12], 0
    %22 = vsyncpa [#allocation7], 0
    %s23 = scalar_lea.sflag [#allocation7], 1
    %24 = vsyncpa %s23, 0
    loop: start=0, step=1, limit=10
    $region2: #{tpu_custom_call.1} parent=1 // loop_pre_header
      _
    $region3: #{tpu_custom_call.1} parent=1 // loop_header
      %s26 = sphi 0, %s30
      %p27 = scmp.ge.s32.totalorder %s26, 10
      %s33 = sphi 0, %s45
      %s34 = sphi 0, %s41
      %s35 = sphi 0, %s33
      %s36 = sphi 0, %s34
      %s37 = sphi 0, %s35
      %s38 = sphi 0, %s36
      %s50 = sphi 0, %s52
      %s53 = sphi 0, %s50
      %s54 = sphi 0, %s53
      %s70 = sphi 0, %s54
      %s82 = sphi 0, %s84
      %s85 = sphi 0, %s82
      %s86 = sphi 0, %s85
      %s102 = sphi 0, %s86
      %s106 = sphi 0, %s106
      %s108 = sphi 0, %s106
      %s109 = sphi 0, %s108
      %s123 = sphi 0, %s109
      %s127 = sphi 0, %s127
      %s129 = sphi 0, %s127
      %s130 = sphi 0, %s129
      %s144 = sphi 0, %s130
      %s148 = sphi 0, %s148
      %s150 = sphi 0, %s148
      %s151 = sphi 0, %s150
      %s165 = sphi 0, %s151
      %s173 = sphi 0, %s175
      %s176 = sphi 0, %s173
      %s177 = sphi 0, %s176
      %s193 = sphi 0, %s177
    $region4: #{tpu_custom_call.1} parent=1 // loop_header_branch
      %29 = sbr.rel (%p27) target = $region8
    $region5: #{tpu_custom_call.1} parent=1 // loop_body
      %s31 = ssub.s32 %s26, 1
      %s32 = ssub.s32 %s26, 2
      %s39 = sadd.s32 1, %s34
      %p40 = scmp.ge.s32.totalorder %s39, 4
      %s41 = scalar_select %p40, 0, %s39
      %s42 = sadd.s32 1, %s33
      %s43 = scalar_select %p40, %s42, %s33
      %p44 = scmp.ge.s32.totalorder %s43, 2
      %s45 = scalar_select %p44, 0, %s43
      %s46 = ssub.s32 %s33, %s45
      %s47 = ssub.s32 %s34, %s41
      %s48 = sor.u32 %s46, %s47
      %p49 = scmp.eq.s32.totalorder %s48, 0
      %s51 = sadd.s32 %s50, 1
      %s52 = scalar_select %p49, %s50, %s51
      %p55 = pneg %p49
      %p56 = scmp.eq.s32.totalorder %s26, 7
      %p57 = por %p55, %p56
      %p58 = scmp.ne.s32.totalorder %s50, %s53
      %p59 = scmp.eq.s32.totalorder %s26, 0
      %p60 = por %p58, %p59
      %p61 = scmp.ne.s32.totalorder %s50, %s53
      %p62 = scmp.eq.s32.totalorder %s31, 7
      %p63 = por %p61, %p62
      %p64 = scmp.ne.s32.totalorder %s53, %s54
      %p65 = scmp.eq.s32.totalorder %s31, 0
      %p66 = por %p64, %p65
      %p67 = scmp.ne.s32.totalorder %s53, %s54
      %p68 = scmp.eq.s32.totalorder %s32, 7
      %p69 = por %p67, %p68
      %p71 = scmp.ne.s32.totalorder %s54, %s70
      %p72 = scmp.eq.s32.totalorder %s32, 0
      %p73 = por %p71, %p72
      %s74 = sadd.s32 %s34, 1
      %s75 = smul.u32 %s74, 2
      %s76 = sadd.s32 %s41, 1
      %s77 = smul.u32 %s76, 2
      %s78 = ssub.s32 %s33, %s45
      %s79 = ssub.s32 %s75, %s77
      %s80 = sor.u32 %s78, %s79
      %p81 = scmp.eq.s32.totalorder %s80, 0
      %s83 = sadd.s32 %s82, 1
      %s84 = scalar_select %p81, %s82, %s83
      %p87 = pneg %p81
      %p88 = scmp.eq.s32.totalorder %s26, 7
      %p89 = por %p87, %p88
      %p90 = scmp.ne.s32.totalorder %s82, %s85
      %p91 = scmp.eq.s32.totalorder %s26, 0
      %p92 = por %p90, %p91
      %p93 = scmp.ne.s32.totalorder %s82, %s85
      %p94 = scmp.eq.s32.totalorder %s31, 7
      %p95 = por %p93, %p94
      %p96 = scmp.ne.s32.totalorder %s85, %s86
      %p97 = scmp.eq.s32.totalorder %s31, 0
      %p98 = por %p96, %p97
      %p99 = scmp.ne.s32.totalorder %s85, %s86
      %p100 = scmp.eq.s32.totalorder %s32, 7
      %p101 = por %p99, %p100
      %p103 = scmp.ne.s32.totalorder %s86, %s102
      %p104 = scmp.eq.s32.totalorder %s32, 0
      %p105 = por %p103, %p104
      %s107 = sadd.s32 %s106, 1
      %p110 = scmp.eq.s32.totalorder %s26, 7
      %p111 = scmp.ne.s32.totalorder %s106, %s108
      %p112 = scmp.eq.s32.totalorder %s26, 0
      %p113 = por %p111, %p112
      %p114 = scmp.ne.s32.totalorder %s106, %s108
      %p115 = scmp.eq.s32.totalorder %s31, 7
      %p116 = por %p114, %p115
      %p117 = scmp.ne.s32.totalorder %s108, %s109
      %p118 = scmp.eq.s32.totalorder %s31, 0
      %p119 = por %p117, %p118
      %p120 = scmp.ne.s32.totalorder %s108, %s109
      %p121 = scmp.eq.s32.totalorder %s32, 7
      %p122 = por %p120, %p121
      %p124 = scmp.ne.s32.totalorder %s109, %s123
      %p125 = scmp.eq.s32.totalorder %s32, 0
      %p126 = por %p124, %p125
      %s128 = sadd.s32 %s127, 1
      %p131 = scmp.eq.s32.totalorder %s26, 7
      %p132 = scmp.ne.s32.totalorder %s127, %s129
      %p133 = scmp.eq.s32.totalorder %s26, 0
      %p134 = por %p132, %p133
      %p135 = scmp.ne.s32.totalorder %s127, %s129
      %p136 = scmp.eq.s32.totalorder %s31, 7
      %p137 = por %p135, %p136
      %p138 = scmp.ne.s32.totalorder %s129, %s130
      %p139 = scmp.eq.s32.totalorder %s31, 0
      %p140 = por %p138, %p139
      %p141 = scmp.ne.s32.totalorder %s129, %s130
      %p142 = scmp.eq.s32.totalorder %s32, 7
      %p143 = por %p141, %p142
      %p145 = scmp.ne.s32.totalorder %s130, %s144
      %p146 = scmp.eq.s32.totalorder %s32, 0
      %p147 = por %p145, %p146
      %s149 = sadd.s32 %s148, 1
      %p152 = scmp.eq.s32.totalorder %s26, 7
      %p153 = scmp.ne.s32.totalorder %s148, %s150
      %p154 = scmp.eq.s32.totalorder %s26, 0
      %p155 = por %p153, %p154
      %p156 = scmp.ne.s32.totalorder %s148, %s150
      %p157 = scmp.eq.s32.totalorder %s31, 7
      %p158 = por %p156, %p157
      %p159 = scmp.ne.s32.totalorder %s150, %s151
      %p160 = scmp.eq.s32.totalorder %s31, 0
      %p161 = por %p159, %p160
      %p162 = scmp.ne.s32.totalorder %s150, %s151
      %p163 = scmp.eq.s32.totalorder %s32, 7
      %p164 = por %p162, %p163
      %p166 = scmp.ne.s32.totalorder %s151, %s165
      %p167 = scmp.eq.s32.totalorder %s32, 0
      %p168 = por %p166, %p167
      %s169 = ssub.s32 %s33, %s45
      %s170 = ssub.s32 %s34, %s41
      %s171 = sor.u32 %s169, %s170
      %p172 = scmp.eq.s32.totalorder %s171, 0
      %s174 = sadd.s32 %s173, 1
      %s175 = scalar_select %p172, %s173, %s174
      %p178 = pneg %p172
      %p179 = scmp.eq.s32.totalorder %s26, 7
      %p180 = por %p178, %p179
      %p181 = scmp.ne.s32.totalorder %s173, %s176
      %p182 = scmp.eq.s32.totalorder %s26, 0
      %p183 = por %p181, %p182
      %p184 = scmp.ne.s32.totalorder %s173, %s176
      %p185 = scmp.eq.s32.totalorder %s31, 7
      %p186 = por %p184, %p185
      %p187 = scmp.ne.s32.totalorder %s176, %s177
      %p188 = scmp.eq.s32.totalorder %s31, 0
      %p189 = por %p187, %p188
      %p190 = scmp.ne.s32.totalorder %s176, %s177
      %p191 = scmp.eq.s32.totalorder %s32, 7
      %p192 = por %p190, %p191
      %p194 = scmp.ne.s32.totalorder %s177, %s193
      %p195 = scmp.eq.s32.totalorder %s32, 0
      %p196 = por %p194, %p195
      %p197 = scmp.le.s32.totalorder 1, %s26
      %p198 = scmp.lt.s32.totalorder %s26, 9
      %p199 = pnand %p197, %p198
      %p200 = pneg %p199
      // Predicated region
      $region9: #{tpu_custom_call.1} parent=5 // pred_check
        _
      $region10: #{tpu_custom_call.1} parent=5 // pred_check_branch
        %202 = sbr.rel (%p199) target = $region12
      $region11: #{tpu_custom_call.1} parent=5 // pred_region
        %s203 = ssub.s32 %s26, 1
        // Predicated region
        $region13: #{tpu_custom_call.1} parent=11 // pred_check
          %p204 = pneg %p119
        $region14: #{tpu_custom_call.1} parent=11 // pred_check_branch
          %206 = sbr.rel (%p204) target = $region16
        $region15: #{tpu_custom_call.1} parent=11 // pred_region
          %s208 = ssub.s32 256, 256
          %209 = vsyncadd [#allocation9], %s208
          %s210 = sshll.u32 [#allocation10], 4
          %s211 = int_to_ptr.vmem [resolvable:$true] %s210
          %216 = dma.hbm_to_vmem [thread:$0]  %s3, 256, %s211, [#allocation9], 128, 128, 8
        $region16: #{tpu_custom_call.1} parent=11 // pred_fallthru
          _
        // Predicated region
        $region17: #{tpu_custom_call.1} parent=11 // pred_check
          %p217 = pneg %p140
        $region18: #{tpu_custom_call.1} parent=11 // pred_check_branch
          %219 = sbr.rel (%p217) target = $region20
        $region19: #{tpu_custom_call.1} parent=11 // pred_region
          %s221 = ssub.s32 1024, 1024
          %222 = vsyncadd [#allocation12], %s221
          %s223 = sshll.u32 [#allocation11], 4
          %s224 = int_to_ptr.vmem [resolvable:$true] %s223
          %229 = dma.hbm_to_vmem [thread:$0]  %s4, 1024, %s224, [#allocation12], 64, 64, 4
        $region20: #{tpu_custom_call.1} parent=11 // pred_fallthru
          _
        // Predicated region
        $region21: #{tpu_custom_call.1} parent=11 // pred_check
          %p230 = pneg %p161
        $region22: #{tpu_custom_call.1} parent=11 // pred_check_branch
          %232 = sbr.rel (%p230) target = $region24
        $region23: #{tpu_custom_call.1} parent=11 // pred_region
          _
        $region24: #{tpu_custom_call.1} parent=11 // pred_fallthru
          _
      $region12: #{tpu_custom_call.1} parent=5 // pred_fallthru
        _
      %p233 = scmp.lt.s32.totalorder %s26, 8
      // Predicated region
      $region25: #{tpu_custom_call.1} parent=5 // pred_check
        %p234 = pneg %p233
      $region26: #{tpu_custom_call.1} parent=5 // pred_check_branch
        %236 = sbr.rel (%p234) target = $region28
      $region27: #{tpu_custom_call.1} parent=5 // pred_region
        // Predicated region
        $region29: #{tpu_custom_call.1} parent=27 // pred_check
          %p237 = pneg %p60
        $region30: #{tpu_custom_call.1} parent=27 // pred_check_branch
          %239 = sbr.rel (%p237) target = $region32
        $region31: #{tpu_custom_call.1} parent=27 // pred_region
          %s240 = sand.u32 %s50, 1
          %s241 = scalar_lea.sflag [#allocation6], %s240
          %s242 = sand.u32 %s50, 1
          %s243 = smul.addr %s242, 16
          %s244 = scalar_lea.vmem [#allocation5], %s243
          %s245 = smul.u32 4, %s34
          %s246 = ssub.s32 18, %s245
          %p247 = scmp.lt.s32.totalorder %s246, 4
          %s248 = scalar_select %p247, %s246, 4
          %s249 = smul.u32 64, %s248
          %s251 = ssub.s32 256, %s249
          %252 = vsyncadd %s241, %s251
          %p253 = scmp.ne.s32.totalorder 0, %s249
          %s254 = smul.addr %s33, 18
          %s255 = sadd.s32 %s245, %s254
          %s256 = smul.addr %s255, 64
          %s257 = scalar_lea.hbm %s1, %s256
          %s258 = smul.u32 4, %s248
          %s259 = sshll.u32 %s244, 4
          %s260 = int_to_ptr.vmem [resolvable:$true] %s259
          %s261 = sshll.u32 %s258, 4
          %265 = dma.hbm_to_vmem [thread:$0]  (%p253), %s257, %s261, %s260, %s241, 64, 64, 4
        $region32: #{tpu_custom_call.1} parent=27 // pred_fallthru
          _
        // Predicated region
        $region33: #{tpu_custom_call.1} parent=27 // pred_check
          %p266 = pneg %p92
        $region34: #{tpu_custom_call.1} parent=27 // pred_check_branch
          %268 = sbr.rel (%p266) target = $region36
        $region35: #{tpu_custom_call.1} parent=27 // pred_region
          %s269 = sand.u32 %s26, 1
          %s270 = scalar_lea.sflag [#allocation9], %s269
          %s271 = sand.u32 %s82, 1
          %s272 = smul.addr %s271, 8
          %s273 = scalar_lea.vmem [#allocation8], %s272
          %s274 = sadd.s32 %s34, 1
          %s275 = smul.u32 %s274, 2
          %s276 = smul.u32 2, %s275
          %s278 = ssub.s32 128, 128
          %279 = vsyncadd %s270, %s278
          %s280 = smul.addr %s33, 18
          %s281 = sadd.s32 %s276, %s280
          %s282 = smul.addr %s281, 64
          %s283 = scalar_lea.hbm %s2, %s282
          %s284 = sshll.u32 %s273, 4
          %s285 = int_to_ptr.vmem [resolvable:$true] %s284
          %290 = dma.hbm_to_vmem [thread:$0]  %s283, 128, %s285, %s270, 64, 64, 4
        $region36: #{tpu_custom_call.1} parent=27 // pred_fallthru
          _
      $region28: #{tpu_custom_call.1} parent=5 // pred_fallthru
        _
      %p291 = scmp.le.s32.totalorder 1, %s26
      %p292 = scmp.lt.s32.totalorder %s26, 9
      %p293 = pnand %p291, %p292
      %p294 = pneg %p293
      // Predicated region
      $region37: #{tpu_custom_call.1} parent=5 // pred_check
        _
      $region38: #{tpu_custom_call.1} parent=5 // pred_check_branch
        %296 = sbr.rel (%p293) target = $region40
      $region39: #{tpu_custom_call.1} parent=5 // pred_region
        %s297 = ssub.s32 %s26, 1
        %s298 = sand.u32 %s53, 1
        %s299 = scalar_lea.sflag [#allocation6], %s298
        %s300 = sand.u32 %s53, 1
        %s301 = smul.addr %s300, 16
        %s302 = scalar_lea.vmem [#allocation5], %s301
        // Predicated region
        $region41: #{tpu_custom_call.1} parent=39 // pred_check
          %p303 = pneg %p66
        $region42: #{tpu_custom_call.1} parent=39 // pred_check_branch
          %305 = sbr.rel (%p303) target = $region44
        $region43: #{tpu_custom_call.1} parent=39 // pred_region
          %306 = dma.done %s299, 256
        $region44: #{tpu_custom_call.1} parent=39 // pred_fallthru
          _
        %s307 = sand.u32 %s31, 1
        %s308 = scalar_lea.sflag [#allocation9], %s307
        %s309 = sand.u32 %s85, 1
        %s310 = smul.addr %s309, 8
        %s311 = scalar_lea.vmem [#allocation8], %s310
        // Predicated region
        $region45: #{tpu_custom_call.1} parent=39 // pred_check
          %p312 = pneg %p98
        $region46: #{tpu_custom_call.1} parent=39 // pred_check_branch
          %314 = sbr.rel (%p312) target = $region48
        $region47: #{tpu_custom_call.1} parent=39 // pred_region
          %315 = dma.done %s308, 128
        $region48: #{tpu_custom_call.1} parent=39 // pred_fallthru
          _
        // Predicated region
        $region49: #{tpu_custom_call.1} parent=39 // pred_check
          %p316 = pneg %p119
        $region50: #{tpu_custom_call.1} parent=39 // pred_check_branch
          %318 = sbr.rel (%p316) target = $region52
        $region51: #{tpu_custom_call.1} parent=39 // pred_region
          %319 = dma.done [#allocation9], 256
        $region52: #{tpu_custom_call.1} parent=39 // pred_fallthru
          _
        // Predicated region
        $region53: #{tpu_custom_call.1} parent=39 // pred_check
          %p320 = pneg %p140
        $region54: #{tpu_custom_call.1} parent=39 // pred_check_branch
          %322 = sbr.rel (%p320) target = $region56
        $region55: #{tpu_custom_call.1} parent=39 // pred_region
          %323 = dma.done [#allocation12], 1024
        $region56: #{tpu_custom_call.1} parent=39 // pred_fallthru
          _
        %s324 = sand.u32 %s53, 1
        %s325 = scalar_lea.sflag [#allocation6], %s324
        %s326 = sand.u32 %s53, 1
        %s327 = smul.addr %s326, 16
        %s328 = scalar_lea.vmem [#allocation5], %s327
        %p329 = pneg %p66
        %p330 = pneg %p63
        %s331 = sand.u32 %s31, 1
        %s332 = scalar_lea.sflag [#allocation9], %s331
        %s333 = sand.u32 %s85, 1
        %s334 = smul.addr %s333, 8
        %s335 = scalar_lea.vmem [#allocation8], %s334
        %p336 = pneg %p98
        %p337 = pneg %p95
        %p338 = pneg %p119
        %p339 = pneg %p116
        %p340 = pneg %p140
        %p341 = pneg %p137
        %p342 = pneg %p161
        %p343 = pneg %p158
        %p344 = pneg %p189
        %p345 = pneg %p186
        %s346 = sand.u32 %s176, 1
        %s347 = scalar_lea.sflag [#allocation7], %s346
        %s348 = sand.u32 %s176, 1
        %s349 = smul.addr %s348, 16
        %s350 = scalar_lea.vmem [#allocation13], %s349
        %s351 = smul.u32 4, %s36
        %s352 = ssub.s32 18, %s351
        %p353 = scmp.lt.s32.totalorder %s352, 4
        %s354 = scalar_select %p353, %s352, 4
        %s355 = smul.u32 64, %s354
        %s356 = sadd.s32 %s36, 1
        %s357 = smul.u32 %s356, 2
        %s358 = smul.u32 2, %s357
        %s359 = smul.u32 4, %s36
        %s361 = sld [smem:[#allocation4 + %s35]]
        %s362 = smul.u32 %s36, 32
        %p363 = scmp.lt.s32.totalorder %s362, %s361
        // Predicated region
        $region57: #{tpu_custom_call.1} parent=39 // pred_check
          %p364 = pneg %p363
        $region58: #{tpu_custom_call.1} parent=39 // pred_check_branch
          %366 = sbr.rel (%p364) target = $region60
        $region59: #{tpu_custom_call.1} parent=39 // pred_region
          %v367 = vld [vmem:[%s302] sm:$0xf]
          %v368 = vld [vmem:[%s302 + $0x4] sm:$0xf]
          %v369 = vld [vmem:[%s302 + $0x8] sm:$0xf]
          %v370 = vld [vmem:[%s302 + $0xc] sm:$0xf]
          %v371 = vunpack.c.l.bf16 %v367
          %v372 = vunpack.c.l.bf16 %v368
          %v373 = vunpack.c.l.bf16 %v369
          %v374 = vunpack.c.l.bf16 %v370
          %375 = vst [vmem:[#allocation2] sm:$0xff] %v371
          %376 = vst [vmem:[#allocation2 + $0x8] sm:$0xff] %v372
          %377 = vst [vmem:[#allocation2 + $0x10] sm:$0xff] %v373
          %378 = vst [vmem:[#allocation2 + $0x18] sm:$0xff] %v374
          %v379 = vld [vmem:[%s311] sm:$0xf]
          %v380 = vld [vmem:[%s311 + $0x4] sm:$0xf]
          %v381 = vunpack.c.l.bf16 %v379
          %v382 = vunpack.c.l.bf16 %v380
          %383 = vst [vmem:[#allocation2 + $0x20] sm:$0xff] %v381
          %384 = vst [vmem:[#allocation2 + $0x28] sm:$0xff] %v382
          %v385 = vld [vmem:[#allocation2] sm:$0xff]
          %v386 = vld [vmem:[#allocation2 + $0x8] sm:$0xff]
          %v387 = vld [vmem:[#allocation2 + $0x10] sm:$0xff]
          %v388 = vld [vmem:[#allocation2 + $0x18] sm:$0xff]
          %v389 = vld [vmem:[#allocation10] sm:$0x1]
          %v390 = vlaneseq
          %v391 = vshrl.u32 %v390, 7
          %v392 = vsub.s32 0, %v391
          %v393 = vrot.slane %v389, %v392
          %v394 = vmul.f32 %v385, %v393
          %v395 = vmul.f32 %v386, %v393
          %v396 = vmul.f32 %v387, %v393
          %v397 = vmul.f32 %v388, %v393
          %v398 = vld [vmem:[#allocation2 + $0x1] sm:$0xff]
          %v399 = vld [vmem:[#allocation2 + $0x9] sm:$0xff]
          %v400 = vld [vmem:[#allocation2 + $0x11] sm:$0xff]
          %v401 = vld [vmem:[#allocation2 + $0x19] sm:$0xff]
          %v402 = vld [vmem:[#allocation10 + $0x1] sm:$0x1]
          %v403 = vlaneseq
          %v404 = vshrl.u32 %v403, 7
          %v405 = vsub.s32 0, %v404
          %v406 = vrot.slane %v402, %v405
          %v407 = vmul.f32 %v398, %v406
          %v408 = vmul.f32 %v399, %v406
          %v409 = vmul.f32 %v400, %v406
          %v410 = vmul.f32 %v401, %v406
          %v411 = vadd.f32 %v394, %v407
          %v412 = vadd.f32 %v395, %v408
          %v413 = vadd.f32 %v396, %v409
          %v414 = vadd.f32 %v397, %v410
          %v415 = vld [vmem:[#allocation2 + $0x2] sm:$0xff]
          %v416 = vld [vmem:[#allocation2 + $0xa] sm:$0xff]
          %v417 = vld [vmem:[#allocation2 + $0x12] sm:$0xff]
          %v418 = vld [vmem:[#allocation2 + $0x1a] sm:$0xff]
          %v419 = vld [vmem:[#allocation10 + $0x2] sm:$0x1]
          %v420 = vlaneseq
          %v421 = vshrl.u32 %v420, 7
          %v422 = vsub.s32 0, %v421
          %v423 = vrot.slane %v419, %v422
          %v424 = vmul.f32 %v415, %v423
          %v425 = vmul.f32 %v416, %v423
          %v426 = vmul.f32 %v417, %v423
          %v427 = vmul.f32 %v418, %v423
          %v428 = vadd.f32 %v411, %v424
          %v429 = vadd.f32 %v412, %v425
          %v430 = vadd.f32 %v413, %v426
          %v431 = vadd.f32 %v414, %v427
          %v432 = vld [vmem:[#allocation2 + $0x3] sm:$0xff]
          %v433 = vld [vmem:[#allocation2 + $0xb] sm:$0xff]
          %v434 = vld [vmem:[#allocation2 + $0x13] sm:$0xff]
          %v435 = vld [vmem:[#allocation2 + $0x1b] sm:$0xff]
          %v436 = vld [vmem:[#allocation10 + $0x3] sm:$0x1]
          %v437 = vlaneseq
          %v438 = vshrl.u32 %v437, 7
          %v439 = vsub.s32 0, %v438
          %v440 = vrot.slane %v436, %v439
          %v441 = vmul.f32 %v432, %v440
          %v442 = vmul.f32 %v433, %v440
          %v443 = vmul.f32 %v434, %v440
          %v444 = vmul.f32 %v435, %v440
          %v445 = vadd.f32 %v428, %v441
          %v446 = vadd.f32 %v429, %v442
          %v447 = vadd.f32 %v430, %v443
          %v448 = vadd.f32 %v431, %v444
          %v449 = vld [vmem:[#allocation2 + $0x4] sm:$0xff]
          %v450 = vld [vmem:[#allocation2 + $0xc] sm:$0xff]
          %v451 = vld [vmem:[#allocation2 + $0x14] sm:$0xff]
          %v452 = vld [vmem:[#allocation2 + $0x1c] sm:$0xff]
          %v453 = vld [vmem:[#allocation10 + $0x4] sm:$0x1]
          %v454 = vlaneseq
          %v455 = vshrl.u32 %v454, 7
          %v456 = vsub.s32 0, %v455
          %v457 = vrot.slane %v453, %v456
          %v458 = vmul.f32 %v449, %v457
          %v459 = vmul.f32 %v450, %v457
          %v460 = vmul.f32 %v451, %v457
          %v461 = vmul.f32 %v452, %v457
          %v462 = vadd.f32 %v445, %v458
          %v463 = vadd.f32 %v446, %v459
          %v464 = vadd.f32 %v447, %v460
          %v465 = vadd.f32 %v448, %v461
          %v466 = vld [vmem:[#allocation2 + $0x5] sm:$0xff]
          %v467 = vld [vmem:[#allocation2 + $0xd] sm:$0xff]
          %v468 = vld [vmem:[#allocation2 + $0x15] sm:$0xff]
          %v469 = vld [vmem:[#allocation2 + $0x1d] sm:$0xff]
          %v470 = vld [vmem:[#allocation10 + $0x5] sm:$0x1]
          %v471 = vlaneseq
          %v472 = vshrl.u32 %v471, 7
          %v473 = vsub.s32 0, %v472
          %v474 = vrot.slane %v470, %v473
          %v475 = vmul.f32 %v466, %v474
          %v476 = vmul.f32 %v467, %v474
          %v477 = vmul.f32 %v468, %v474
          %v478 = vmul.f32 %v469, %v474
          %v479 = vadd.f32 %v462, %v475
          %v480 = vadd.f32 %v463, %v476
          %v481 = vadd.f32 %v464, %v477
          %v482 = vadd.f32 %v465, %v478
          %v483 = vld [vmem:[#allocation2 + $0x6] sm:$0xff]
          %v484 = vld [vmem:[#allocation2 + $0xe] sm:$0xff]
          %v485 = vld [vmem:[#allocation2 + $0x16] sm:$0xff]
          %v486 = vld [vmem:[#allocation2 + $0x1e] sm:$0xff]
          %v487 = vld [vmem:[#allocation10 + $0x6] sm:$0x1]
          %v488 = vlaneseq
          %v489 = vshrl.u32 %v488, 7
          %v490 = vsub.s32 0, %v489
          %v491 = vrot.slane %v487, %v490
          %v492 = vmul.f32 %v483, %v491
          %v493 = vmul.f32 %v484, %v491
          %v494 = vmul.f32 %v485, %v491
          %v495 = vmul.f32 %v486, %v491
          %v496 = vadd.f32 %v479, %v492
          %v497 = vadd.f32 %v480, %v493
          %v498 = vadd.f32 %v481, %v494
          %v499 = vadd.f32 %v482, %v495
          %v500 = vld [vmem:[#allocation2 + $0x7] sm:$0xff]
          %v501 = vld [vmem:[#allocation2 + $0xf] sm:$0xff]
          %v502 = vld [vmem:[#allocation2 + $0x17] sm:$0xff]
          %v503 = vld [vmem:[#allocation2 + $0x1f] sm:$0xff]
          %v504 = vld [vmem:[#allocation10 + $0x7] sm:$0x1]
          %v505 = vlaneseq
          %v506 = vshrl.u32 %v505, 7
          %v507 = vsub.s32 0, %v506
          %v508 = vrot.slane %v504, %v507
          %v509 = vmul.f32 %v500, %v508
          %v510 = vmul.f32 %v501, %v508
          %v511 = vmul.f32 %v502, %v508
          %v512 = vmul.f32 %v503, %v508
          %v513 = vadd.f32 %v496, %v509
          %v514 = vadd.f32 %v497, %v510
          %v515 = vadd.f32 %v498, %v511
          %v516 = vadd.f32 %v499, %v512
          %v517 = vld [vmem:[#allocation2 + $0x20] sm:$0xff]
          %v518 = vld [vmem:[#allocation10 + $0x8] sm:$0x1]
          %v519 = vlaneseq
          %v520 = vshrl.u32 %v519, 7
          %v521 = vsub.s32 0, %v520
          %v522 = vrot.slane %v518, %v521
          %v523 = vmul.f32 %v386, %v522
          %v524 = vmul.f32 %v387, %v522
          %v525 = vmul.f32 %v388, %v522
          %v526 = vmul.f32 %v517, %v522
          %v527 = vadd.f32 %v513, %v523
          %v528 = vadd.f32 %v514, %v524
          %v529 = vadd.f32 %v515, %v525
          %v530 = vadd.f32 %v516, %v526
          %v531 = vld [vmem:[#allocation2 + $0x21] sm:$0xff]
          %v532 = vld [vmem:[#allocation10 + $0x9] sm:$0x1]
          %v533 = vlaneseq
          %v534 = vshrl.u32 %v533, 7
          %v535 = vsub.s32 0, %v534
          %v536 = vrot.slane %v532, %v535
          %v537 = vmul.f32 %v399, %v536
          %v538 = vmul.f32 %v400, %v536
          %v539 = vmul.f32 %v401, %v536
          %v540 = vmul.f32 %v531, %v536
          %v541 = vadd.f32 %v527, %v537
          %v542 = vadd.f32 %v528, %v538
          %v543 = vadd.f32 %v529, %v539
          %v544 = vadd.f32 %v530, %v540
          %v545 = vld [vmem:[#allocation2 + $0x22] sm:$0xff]
          %v546 = vld [vmem:[#allocation10 + $0xa] sm:$0x1]
          %v547 = vlaneseq
          %v548 = vshrl.u32 %v547, 7
          %v549 = vsub.s32 0, %v548
          %v550 = vrot.slane %v546, %v549
          %v551 = vmul.f32 %v416, %v550
          %v552 = vmul.f32 %v417, %v550
          %v553 = vmul.f32 %v418, %v550
          %v554 = vmul.f32 %v545, %v550
          %v555 = vadd.f32 %v541, %v551
          %v556 = vadd.f32 %v542, %v552
          %v557 = vadd.f32 %v543, %v553
          %v558 = vadd.f32 %v544, %v554
          %v559 = vlaneseq
          %v560 = vshrl.u32 %v559, 7
          %v561 = vadd.s32 %v560, 8
          %v562 = vadd.s32 %v560, 16
          %v563 = vadd.s32 %v560, 24
          %v564 = vstv %s362
          %v565 = vadd.s32 %v564, %v560
          %v566 = vadd.s32 %v564, %v561
          %v567 = vadd.s32 %v564, %v562
          %v568 = vadd.s32 %v564, %v563
          %v569 = vstv %s361
          %vm570 = vcmp.lt.s32.totalorder %v565, %v569
          %vm571 = vcmp.lt.s32.totalorder %v566, %v569
          %vm572 = vcmp.lt.s32.totalorder %v567, %v569
          %vm573 = vcmp.lt.s32.totalorder %v568, %v569
          %v574 = vsel %vm570, 1, 0
          %v575 = vsel %vm571, 1, 0
          %v576 = vsel %vm572, 1, 0
          %v577 = vsel %vm573, 1, 0
          %vm578 = vcmp.eq.s32.totalorder %v574, 1
          %vm579 = vcmp.eq.s32.totalorder %v575, 1
          %vm580 = vcmp.eq.s32.totalorder %v576, 1
          %vm581 = vcmp.eq.s32.totalorder %v577, 1
          %v582 = vsel %vm578, %v555, 0.0
          %v583 = vsel %vm579, %v556, 0.0
          %v584 = vsel %vm580, %v557, 0.0
          %v585 = vsel %vm581, %v558, 0.0
          %v586 = vpack.c.bf16 %v583, %v582
          %v587 = vpack.c.bf16 %v585, %v584
          %v588 = vld [vmem:[#allocation11] sm:$0xf]
          %v589 = vld [vmem:[#allocation11 + $0x4] sm:$0xf]
          %v590 = vld [vmem:[#allocation11 + $0x8] sm:$0xf]
          %v591 = vld [vmem:[#allocation11 + $0xc] sm:$0xf]
          %v592 = vld [vmem:[#allocation11 + $0x10] sm:$0xf]
          %v593 = vld [vmem:[#allocation11 + $0x14] sm:$0xf]
          %v594 = vld [vmem:[#allocation11 + $0x18] sm:$0xf]
          %v595 = vld [vmem:[#allocation11 + $0x1c] sm:$0xf]
          %v596 = vld [vmem:[#allocation11 + $0x20] sm:$0xf]
          %v597 = vld [vmem:[#allocation11 + $0x24] sm:$0xf]
          %v598 = vld [vmem:[#allocation11 + $0x28] sm:$0xf]
          %v599 = vld [vmem:[#allocation11 + $0x2c] sm:$0xf]
          %v600 = vld [vmem:[#allocation11 + $0x30] sm:$0xf]
          %v601 = vld [vmem:[#allocation11 + $0x34] sm:$0xf]
          %v602 = vld [vmem:[#allocation11 + $0x38] sm:$0xf]
          %v603 = vld [vmem:[#allocation11 + $0x3c] sm:$0xf]
          %v604 = vld [vmem:[%s5] sm:$0x1]
          %v606 = vlaneseq
          %v607 = vshrl.u32 %v606, 7
          %v608 = vsub.s32 0, %v607
          %v609 = vrot.slane %v604, %v608
          %v627 = vunpack.c.l.b16 %v588
          %v628 = vunpack.c.l.b16 %v589
          %v629 = vunpack.c.l.b16 %v590
          %v630 = vunpack.c.l.b16 %v591
          %v631 = vunpack.c.l.b16 %v592
          %v632 = vunpack.c.l.b16 %v593
          %v633 = vunpack.c.l.b16 %v594
          %v634 = vunpack.c.l.b16 %v595
          %v635 = vunpack.c.l.b16 %v596
          %v636 = vunpack.c.l.b16 %v597
          %v637 = vunpack.c.l.b16 %v598
          %v638 = vunpack.c.l.b16 %v599
          %v639 = vunpack.c.l.b16 %v600
          %v640 = vunpack.c.l.b16 %v601
          %v641 = vunpack.c.l.b16 %v602
          %v642 = vunpack.c.l.b16 %v603
          %v643 = vpack.c.b16 %v628, %v627
          %v644 = vpack.c.b16 %v630, %v629
          %v645 = vpack.c.b16 %v632, %v631
          %v646 = vpack.c.b16 %v634, %v633
          %v647 = vpack.c.b16 %v636, %v635
          %v648 = vpack.c.b16 %v638, %v637
          %v649 = vpack.c.b16 %v640, %v639
          %v650 = vpack.c.b16 %v642, %v641
          %659 = vmatprep.subr.bf16.mxu0 0
          %660 = vmatpush1.bf16.msra.mxu0 %v643
          %661 = vmatprep.subr.bf16.mxu0 0
          %662 = vmatpush1.bf16.msra.mxu0 %v644
          %663 = vmatprep.subr.bf16.mxu0 0
          %664 = vmatpush1.bf16.msra.mxu0 %v645
          %665 = vmatprep.subr.bf16.mxu0 0
          %666 = vmatpush1.bf16.msra.mxu0 %v646
          %667 = vmatprep.subr.bf16.mxu0 0
          %668 = vmatpush1.bf16.msra.mxu0 %v647
          %669 = vmatprep.subr.bf16.mxu0 0
          %670 = vmatpush1.bf16.msra.mxu0 %v648
          %671 = vmatprep.subr.bf16.mxu0 0
          %672 = vmatpush1.bf16.msra.mxu0 %v649
          %673 = vmatprep.subr.bf16.mxu0 0
          %674 = vmatpush1.bf16.msra.mxu0 %v650
          %675 = vmatprep.subr.bf16.mxu0 0
          %676 = vmatpush1.bf16.msra.mxu0 0
          %677 = vmatprep.subr.bf16.mxu0 0
          %678 = vmatpush1.bf16.msra.mxu0 0
          %679 = vmatprep.subr.bf16.mxu0 0
          %680 = vmatpush1.bf16.msra.mxu0 0
          %681 = vmatprep.subr.bf16.mxu0 0
          %682 = vmatpush1.bf16.msra.mxu0 0
          %683 = vmatprep.subr.bf16.mxu0 0
          %684 = vmatpush1.bf16.msra.mxu0 0
          %685 = vmatprep.subr.bf16.mxu0 0
          %686 = vmatpush1.bf16.msra.mxu0 0
          %687 = vmatprep.subr.bf16.mxu0 0
          %688 = vmatpush1.bf16.msra.mxu0 0
          %689 = vmatprep.subr.bf16.mxu0 0
          %690 = vmatpush1.bf16.msra.mxu0 0
          %691 = vmatprep.mubr.bf16.mxu0 0
          %692 = vmatmul.mubr.bf16.gmra.mrb[0].mxu0 %v586
          %v693 = vpop.f32.mrb[0].mxu0
          %v694 = vadd.f32 %v609, %v693
          %v695 = vpop.f32.mrb[0].mxu0
          %v696 = vpop.f32.mrb[0].mxu0
          %v697 = vadd.f32 %v609, %v696
          %v698 = vpop.f32.mrb[0].mxu0
          %699 = vmatprep.mubr.bf16.mxu0 0
          %700 = vmatmul.mubr.bf16.gmra.mrb[0].mxu0 %v587
          %v701 = vpop.f32.mrb[0].mxu0
          %v702 = vadd.f32 %v609, %v701
          %v703 = vpop.f32.mrb[0].mxu0
          %v704 = vpop.f32.mrb[0].mxu0
          %v705 = vadd.f32 %v609, %v704
          %v706 = vpop.f32.mrb[0].mxu0
          %707 = vdwg.mxu0
          %v708 = vmax.f32 %v694, 0.0
          %v709 = vmax.f32 %v697, 0.0
          %v710 = vmax.f32 %v702, 0.0
          %v711 = vmax.f32 %v705, 0.0
          %v712 = vpack.c.bf16 %v709, %v708
          %v713 = vpack.c.bf16 %v711, %v710
          %v716 = vunpack.c.l.b16 %v712
          %v717 = vunpack.c.h.b16 %v712
          %v718 = vunpack.c.l.b16 %v713
          %v719 = vunpack.c.h.b16 %v713
          %v720 = vpack.c.b16 %v716, %v716
          %v721 = vpack.c.b16 %v717, %v717
          %v722 = vpack.c.b16 %v718, %v718
          %v723 = vpack.c.b16 %v719, %v719
          %728 = vst [vmem:[%s350] sm:$0xf] %v720
          %729 = vst [vmem:[%s350 + $0x4] sm:$0xf] %v721
          %730 = vst [vmem:[%s350 + $0x8] sm:$0xf] %v722
          %731 = vst [vmem:[%s350 + $0xc] sm:$0xf] %v723
        $region60: #{tpu_custom_call.1} parent=39 // pred_fallthru
          _
        %p732 = scmp.ge.s32.totalorder %s362, %s361
        // Predicated region
        $region61: #{tpu_custom_call.1} parent=39 // pred_check
          %p733 = pneg %p732
        $region62: #{tpu_custom_call.1} parent=39 // pred_check_branch
          %735 = sbr.rel (%p733) target = $region64
        $region63: #{tpu_custom_call.1} parent=39 // pred_region
          %v736 = vld [vmem:[%s5] sm:$0x1]
          %v737 = vmax.f32 %v736, 0.0
          %v739 = vlaneseq
          %v740 = vshrl.u32 %v739, 7
          %v741 = vsub.s32 0, %v740
          %v742 = vrot.slane %v737, %v741
          %v744 = vpack.c.bf16 %v742, %v742
          %v746 = vunpack.c.l.b16 %v744
          %v747 = vpack.c.b16 %v746, %v746
          %749 = vst [vmem:[%s350] sm:$0xf] %v747
          %750 = vst [vmem:[%s350 + $0x4] sm:$0xf] %v747
          %751 = vst [vmem:[%s350 + $0x8] sm:$0xf] %v747
          %752 = vst [vmem:[%s350 + $0xc] sm:$0xf] %v747
        $region64: #{tpu_custom_call.1} parent=39 // pred_fallthru
          _
        %s753 = sand.u32 %s176, 1
        %s754 = scalar_lea.sflag [#allocation7], %s753
        %s755 = sand.u32 %s176, 1
        %s756 = smul.addr %s755, 16
        %s757 = scalar_lea.vmem [#allocation13], %s756
        // Predicated region
        $region65: #{tpu_custom_call.1} parent=39 // pred_check
          %p758 = pneg %p186
        $region66: #{tpu_custom_call.1} parent=39 // pred_check_branch
          %760 = sbr.rel (%p758) target = $region68
        $region67: #{tpu_custom_call.1} parent=39 // pred_region
          %s761 = smul.u32 4, %s36
          %s763 = ssub.s32 256, 256
          %764 = vsyncadd %s754, %s763
          %s765 = smul.addr %s35, 16
          %s766 = sadd.s32 %s761, %s765
          %s767 = smul.addr %s766, 64
          %s768 = scalar_lea.hbm %s6, %s767
          %s769 = sshll.u32 %s757, 4
          %s770 = int_to_ptr.vmem [resolvable:$true] %s769
          %775 = dma.vmem_to_hbm [thread:$0]  %s770, 256, %s768, %s754, 64, 64, 4
        $region68: #{tpu_custom_call.1} parent=39 // pred_fallthru
          _
      $region40: #{tpu_custom_call.1} parent=5 // pred_fallthru
        _
      %p776 = scmp.le.s32.totalorder 2, %s26
      // Predicated region
      $region69: #{tpu_custom_call.1} parent=5 // pred_check
        %p777 = pneg %p776
      $region70: #{tpu_custom_call.1} parent=5 // pred_check_branch
        %779 = sbr.rel (%p777) target = $region72
      $region71: #{tpu_custom_call.1} parent=5 // pred_region
        %s780 = ssub.s32 %s26, 2
        // Predicated region
        $region73: #{tpu_custom_call.1} parent=71 // pred_check
          %p781 = pneg %p192
        $region74: #{tpu_custom_call.1} parent=71 // pred_check_branch
          %783 = sbr.rel (%p781) target = $region76
        $region75: #{tpu_custom_call.1} parent=71 // pred_region
          %s784 = sand.u32 %s177, 1
          %s785 = scalar_lea.sflag [#allocation7], %s784
          %s786 = sand.u32 %s177, 1
          %s787 = smul.addr %s786, 16
          %s788 = scalar_lea.vmem [#allocation13], %s787
          %789 = dma.done %s785, 256
        $region76: #{tpu_custom_call.1} parent=71 // pred_fallthru
          _
      $region72: #{tpu_custom_call.1} parent=5 // pred_fallthru
        _
    $region6: #{tpu_custom_call.1} parent=1 // loop_footer
      %s30 = sadd.s32 1, %s26
    $region7: #{tpu_custom_call.1} parent=1 // loop_footer_branch
      %25 = sbr.rel target = $region3
    $region8: #{tpu_custom_call.1} parent=1 // loop_exit
      _
    %790 = vsyncpa [#allocation6], 1
    %s791 = scalar_lea.sflag [#allocation6], 1
    %792 = vsyncpa %s791, 1
    %793 = vsyncpa [#allocation9], 1
    %s794 = scalar_lea.sflag [#allocation9], 1
    %795 = vsyncpa %s794, 1
    %796 = vsyncpa [#allocation12], 1
    %797 = vsyncpa [#allocation7], 1
    %s798 = scalar_lea.sflag [#allocation7], 1
    %799 = vsyncpa %s798, 1

</llo_original>
